<compile_context>
chip_gen: v7x
topology: tpu7x:2x2x1
jax: 0.10.0
libtpu: 0.0.40
codegen_flags: <defaults>
</compile_context>

<pallas_src>
import functools

import jax
import jax.numpy as jnp
from jax.experimental import pallas as pl
from jax.experimental.pallas import tpu as pltpu


def _moving_avg_kernel(x_ref, o_ref, xpad_ref, *, kernel_size, stride, pad,
                       l_in, l_out, chunk_l):
    """One lane-tile: x_ref (L, TN) -> o_ref (L_out, TN).

    xpad_ref is a (L_pad, TN) VMEM scratch holding the edge-replicated
    sequence; the replication padding is built on-chip (no HBM round trip).
    All loop bounds below are Python ints -> fully static slices.
    """
    n = x_ref.shape[-1]

    # ---- build the replication-padded sequence in VMEM ---------------------
    # Copy the body in bounded sublane chunks to keep live vregs small.
    t0 = 0
    while t0 < l_in:
        cl = min(chunk_l, l_in - t0)
        xpad_ref[pl.ds(pad + t0, cl), :] = x_ref[pl.ds(t0, cl), :]
        t0 += chunk_l
    if pad > 0:
        first = x_ref[pl.ds(0, 1), :]            # (1, n)
        last = x_ref[pl.ds(l_in - 1, 1), :]      # (1, n)
        xpad_ref[pl.ds(0, pad), :] = jnp.broadcast_to(first, (pad, n))
        xpad_ref[pl.ds(pad + l_in, pad), :] = jnp.broadcast_to(last, (pad, n))

    inv_k = 1.0 / float(kernel_size)

    # ---- windowed average, chunked over output rows to bound acc pressure --
    # NOTE: for very large kernel_size a running-sum (cumsum-and-difference)
    # formulation would cut the K tap loads to ~2 per chunk; K is small in the
    # decomposition use-case so the unrolled tap loop is kept.
    t0 = 0
    while t0 < l_out:
        cl = min(chunk_l, l_out - t0)
        acc = jnp.zeros((cl, n), jnp.float32)
        for k in range(kernel_size):
            start = t0 * stride + k
            if stride == 1:
                tap = xpad_ref[pl.ds(start, cl), :]
            else:
                # Strided sublane read; only taken for stride > 1.
                tap = xpad_ref[pl.ds(start, cl, stride), :]
            acc = acc + tap.astype(jnp.float32)
        o_ref[pl.ds(t0, cl), :] = (acc * inv_k).astype(o_ref.dtype)
        t0 += chunk_l


def moving_avg(x, kernel_size, stride=1):
    """x: (B, L, C) -> (B, L_out, C), matching the PyTorch moving_avg module."""
    B, L, C = x.shape
    pad = (kernel_size - 1) // 2
    l_pad = L + 2 * pad
    l_out = (l_pad - kernel_size) // stride + 1

    # Fold batch into the lane axis: the sliding window is independent per
    # (b, c), so viewing the problem as (L, B*C) makes stores lane-dense even
    # when C is small and gives the grid multiple lane tiles to pipeline over.
    n = B * C
    x2 = jnp.transpose(x, (1, 0, 2)).reshape(L, n)

    # Lane tile: multiple of 128 capped at 512, shrunk when L is very long so
    # the double-buffered in/out blocks + padded scratch stay well inside the
    # scoped-VMEM budget on every generation (v5e 16 MiB default scoped,
    # v7x 64 MiB physical).  When n is small, use the full lane width
    # (block dim == full array dim is always allowed).
    if n >= 512:
        tile_n = 512
        while tile_n > 128 and l_pad * tile_n * 4 > 8 * 1024 * 1024:
            tile_n //= 2
    else:
        tile_n = n
    grid_n = pl.cdiv(n, tile_n)

    # Output rows per inner chunk: ~16 f32 vregs of accumulator.
    lane_w = max(tile_n, 128)
    chunk_l = max(8, ((16 * 1024 // lane_w) // 8) * 8)

    kernel = functools.partial(
        _moving_avg_kernel,
        kernel_size=kernel_size,
        stride=stride,
        pad=pad,
        l_in=L,
        l_out=l_out,
        chunk_l=chunk_l,
    )

    out2 = pl.pallas_call(
        kernel,
        out_shape=jax.ShapeDtypeStruct((l_out, n), x.dtype),
        grid_spec=pltpu.PrefetchScalarGridSpec(
            num_scalar_prefetch=0,
            grid=(grid_n,),
            in_specs=[pl.BlockSpec((L, tile_n), lambda j: (0, j))],
            out_specs=pl.BlockSpec((l_out, tile_n), lambda j: (0, j)),
            scratch_shapes=[pltpu.VMEM((l_pad, tile_n), x.dtype)],
        ),
        compiler_params=pltpu.CompilerParams(
            dimension_semantics=("parallel",),
            vmem_limit_bytes=32 * 1024 * 1024,
        ),
    )(x2)

    return jnp.transpose(out2.reshape(l_out, B, C), (1, 0, 2))


def moving_avg_ref(x, kernel_size, stride=1):
    """Pure-JAX reference mirroring the PyTorch forward."""
    pad = (kernel_size - 1) // 2
    front = jnp.repeat(x[:, 0:1, :], pad, axis=1)
    end = jnp.repeat(x[:, -1:, :], pad, axis=1)
    xp = jnp.concatenate([front, x, end], axis=1)
    l_pad = xp.shape[1]
    l_out = (l_pad - kernel_size) // stride + 1
    out = jnp.stack(
        [xp[:, t * stride: t * stride + kernel_size, :].mean(axis=1)
         for t in range(l_out)],
        axis=1,
    )
    return out


if __name__ == "__main__":
    key = jax.random.PRNGKey(0)
    B, L, C = 2, 16, 8
    kernel_size, stride = 5, 1  # AvgPool1d(kernel_size=5, stride=1, padding=0)

    x = jax.random.normal(key, (B, L, C), dtype=jnp.float32)

    out = moving_avg(x, kernel_size, stride)
    out = jax.block_until_ready(out)

    ref = moving_avg_ref(x, kernel_size, stride)
    assert out.shape == ref.shape, (out.shape, ref.shape)
    assert jnp.allclose(out, ref, atol=1e-5, rtol=1e-5), "mismatch vs reference"

    print("KERNEL_OK")
</pallas_src>

<mosaic_0001>
module attributes {stable_mosaic.version = 11 : i64} {
  func.func @_moving_avg_kernel(%arg0: i32, %arg1: memref<16x16xf32, #tpu.memory_space<vmem>>, %arg2: memref<16x16xf32, #tpu.memory_space<vmem>>, %arg3: memref<20x16xf32, #tpu.memory_space<vmem>>) attributes {dimension_semantics = [#tpu.dimension_semantics<parallel>], iteration_bounds = array<i64: 1>, scalar_prefetch = 0 : i64, scratch_operands = 1 : i64, tpu.core_type = #tpu.core_type<tc>, window_params = [{transform_indices = @transform_0, window_bounds = array<i64: 16, 16>}, {transform_indices = @transform_1, window_bounds = array<i64: 16, 16>}]} {
    %c0 = arith.constant 0 : index
    %c0_0 = arith.constant 0 : index
    %0 = vector.load %arg1[%c0, %c0_0] : memref<16x16xf32, #tpu.memory_space<vmem>>, vector<16x16xf32>
    %c2 = arith.constant 2 : index
    %c0_1 = arith.constant 0 : index
    %1 = vector.load %arg3[%c2, %c0_1] : memref<20x16xf32, #tpu.memory_space<vmem>>, vector<16x16xf32>
    tpu.vector_store %arg3[%c2, %c0_1], %0 {strides = array<i32>} : memref<20x16xf32, #tpu.memory_space<vmem>>, vector<16x16xf32>,
    %c0_2 = arith.constant 0 : index
    %c0_3 = arith.constant 0 : index
    %2 = vector.load %arg1[%c0_2, %c0_3] : memref<16x16xf32, #tpu.memory_space<vmem>>, vector<1x16xf32>
    %c15 = arith.constant 15 : index
    %c0_4 = arith.constant 0 : index
    %3 = vector.load %arg1[%c15, %c0_4] : memref<16x16xf32, #tpu.memory_space<vmem>>, vector<1x16xf32>
    %4 = vector.shape_cast %2 : vector<1x16xf32> to vector<1x16xf32>
    %5 = vector.broadcast %4 : vector<1x16xf32> to vector<2x16xf32>
    %c0_5 = arith.constant 0 : index
    %c0_6 = arith.constant 0 : index
    %6 = vector.load %arg3[%c0_5, %c0_6] : memref<20x16xf32, #tpu.memory_space<vmem>>, vector<2x16xf32>
    tpu.vector_store %arg3[%c0_5, %c0_6], %5 {strides = array<i32>} : memref<20x16xf32, #tpu.memory_space<vmem>>, vector<2x16xf32>,
    %7 = vector.shape_cast %3 : vector<1x16xf32> to vector<1x16xf32>
    %8 = vector.broadcast %7 : vector<1x16xf32> to vector<2x16xf32>
    %c18 = arith.constant 18 : index
    %c0_7 = arith.constant 0 : index
    %9 = vector.load %arg3[%c18, %c0_7] : memref<20x16xf32, #tpu.memory_space<vmem>>, vector<2x16xf32>
    tpu.vector_store %arg3[%c18, %c0_7], %8 {strides = array<i32>} : memref<20x16xf32, #tpu.memory_space<vmem>>, vector<2x16xf32>,
    %cst = arith.constant 0.000000e+00 : f32
    %10 = vector.broadcast %cst : f32 to vector<16x16xf32>
    %c0_8 = arith.constant 0 : index
    %c0_9 = arith.constant 0 : index
    %11 = vector.load %arg3[%c0_8, %c0_9] : memref<20x16xf32, #tpu.memory_space<vmem>>, vector<16x16xf32>
    %12 = arith.addf %10, %11 : vector<16x16xf32>
    %c1 = arith.constant 1 : index
    %c0_10 = arith.constant 0 : index
    %13 = vector.load %arg3[%c1, %c0_10] : memref<20x16xf32, #tpu.memory_space<vmem>>, vector<16x16xf32>
    %14 = arith.addf %12, %13 : vector<16x16xf32>
    %c2_11 = arith.constant 2 : index
    %c0_12 = arith.constant 0 : index
    %15 = vector.load %arg3[%c2_11, %c0_12] : memref<20x16xf32, #tpu.memory_space<vmem>>, vector<16x16xf32>
    %16 = arith.addf %14, %15 : vector<16x16xf32>
    %c3 = arith.constant 3 : index
    %c0_13 = arith.constant 0 : index
    %17 = vector.load %arg3[%c3, %c0_13] : memref<20x16xf32, #tpu.memory_space<vmem>>, vector<16x16xf32>
    %18 = arith.addf %16, %17 : vector<16x16xf32>
    %c4 = arith.constant 4 : index
    %c0_14 = arith.constant 0 : index
    %19 = vector.load %arg3[%c4, %c0_14] : memref<20x16xf32, #tpu.memory_space<vmem>>, vector<16x16xf32>
    %20 = arith.addf %18, %19 : vector<16x16xf32>
    %cst_15 = arith.constant 2.000000e-01 : f32
    %21 = vector.broadcast %cst_15 : f32 to vector<16x16xf32>
    %22 = arith.mulf %20, %21 : vector<16x16xf32>
    %c0_16 = arith.constant 0 : index
    %c0_17 = arith.constant 0 : index
    %23 = vector.load %arg2[%c0_16, %c0_17] : memref<16x16xf32, #tpu.memory_space<vmem>>, vector<16x16xf32>
    tpu.vector_store %arg2[%c0_16, %c0_17], %22 {strides = array<i32>} : memref<16x16xf32, #tpu.memory_space<vmem>>, vector<16x16xf32>,
    return
  }
  func.func @transform_0(%arg0: i32) -> (i32, i32) {
    %c0_i32 = arith.constant 0 : i32
    %c0_i32_0 = arith.constant 0 : i32
    return %c0_i32, %arg0 : i32, i32
  }
  func.func @transform_1(%arg0: i32) -> (i32, i32) {
    %c0_i32 = arith.constant 0 : i32
    %c0_i32_0 = arith.constant 0 : i32
    return %c0_i32, %arg0 : i32, i32
  }
}

</mosaic_0001>

<llo_original>
// kernel: tpu_custom_call.1
$region0: #{tpu_custom_call.1}
  #allocation0 [shape = 'u32[]', space=smem, size = 0x4, offset = 0x4, fixed_abs, tag = 'smem constant byte address 0x4 - core index']
  #allocation1 [shape = 'u32[144,128]{1,0:T(1,128)}', space=vmem, size = 0x12000, scoped, tag = 'internal scratch']
  #allocation2 [shape = 'f32[20,16]{1,0:T(8,128)}', space=vmem, size = 0x3000, scoped, tag = 'scratch operand']
  %s0 = inlined_call_operand.hbm [shape: f32[16,16], index: 0, kind: input, shape index: {}]
  %s1 = inlined_call_operand.hbm [shape: f32[16,16], index: 1, kind: output, shape index: {}]
  %s2 = sld [smem:[#allocation0]]
  $region18: #{tpu_custom_call.1} parent=0
    _
  %s4 = ssub.s32 1, %s2
  %s5 = scalar_select 0, %s4, %s2
  $region1: #{tpu_custom_call.1} parent=0
    #allocation3 [shape = 'u8[8192]{0}', space=vmem, size = 0x2000, scoped, tag = 'input window, operand 0, single buffered']
    #allocation4 [shape = 's32[1]{0}', space=sflag, size = 0x4, scoped, tag = 'scoped memory for tpu_custom_call.1']
    #allocation5 [shape = 's32[1]{0}', space=sflag, size = 0x4, scoped, tag = 'scoped memory for tpu_custom_call.1']
    #allocation6 [shape = 'u8[8192]{0}', space=vmem, size = 0x2000, scoped, tag = 'output window, operand 0, single buffered']
    %6 = vsyncpa [#allocation4], 0
    %7 = vsyncpa [#allocation5], 0
    // Predicated region
    $region2: #{tpu_custom_call.1} parent=1 // pred_check
      _
    $region3: #{tpu_custom_call.1} parent=1 // pred_check_branch
      %9 = sbr.rel (0) target = $region5
    $region4: #{tpu_custom_call.1} parent=1 // pred_region
      %s11 = ssub.s32 256, 256
      %12 = vsyncadd [#allocation4], %s11
      %s13 = sshll.u32 [#allocation3], 4
      %s14 = int_to_ptr.vmem [resolvable:$true] %s13
      %19 = dma.hbm_to_vmem [thread:$0]  %s0, 256, %s14, [#allocation4], 128, 128, 8
    $region5: #{tpu_custom_call.1} parent=1 // pred_fallthru
      _
    // Predicated region
    $region6: #{tpu_custom_call.1} parent=1 // pred_check
      _
    $region7: #{tpu_custom_call.1} parent=1 // pred_check_branch
      %21 = sbr.rel (0) target = $region9
    $region8: #{tpu_custom_call.1} parent=1 // pred_region
      %22 = dma.done [#allocation4], 256
    $region9: #{tpu_custom_call.1} parent=1 // pred_fallthru
      _
    %v23 = vld [vmem:[#allocation3] sm:$0xff]
    %v24 = vld [vmem:[#allocation3 + $0x8] sm:$0xff]
    %vm25 = vcmask 130048
    %26 = vst.msk [vmem:[#allocation2 + $0x2] sm:$0xff] %vm25, %v23
    %27 = vst.msk [vmem:[#allocation2 + $0xa] sm:$0xff] %vm25, %v24
    %v28 = vld [vmem:[#allocation3] sm:$0x1]
    %v29 = vld [vmem:[#allocation3 + $0xf] sm:$0x1]
    %v30 = vlaneseq
    %v31 = vshrl.u32 %v30, 7
    %v32 = vsub.s32 0, %v31
    %v33 = vrot.slane %v28, %v32
    %vm34 = vcmask 123904
    %35 = vst.msk [vmem:[#allocation2] sm:$0x3] %vm34, %v33
    %v36 = vlaneseq
    %v37 = vshrl.u32 %v36, 7
    %v38 = vsub.s32 0, %v37
    %v39 = vrot.slane %v29, %v38
    %40 = vst.msk [vmem:[#allocation2 + $0x12] sm:$0x3] %vm34, %v39
    %v41 = vld [vmem:[#allocation2] sm:$0xff]
    %v42 = vld [vmem:[#allocation2 + $0x8] sm:$0xff]
    %v43 = vadd.f32 %v41, 0.0
    %v44 = vadd.f32 %v42, 0.0
    %v45 = vld [vmem:[#allocation2 + $0x1] sm:$0xff]
    %v46 = vld [vmem:[#allocation2 + $0x9] sm:$0xff]
    %v47 = vadd.f32 %v43, %v45
    %v48 = vadd.f32 %v44, %v46
    %v49 = vld [vmem:[#allocation2 + $0x2] sm:$0xff]
    %v50 = vld [vmem:[#allocation2 + $0xa] sm:$0xff]
    %v51 = vadd.f32 %v47, %v49
    %v52 = vadd.f32 %v48, %v50
    %v53 = vld [vmem:[#allocation2 + $0x3] sm:$0xff]
    %v54 = vld [vmem:[#allocation2 + $0xb] sm:$0xff]
    %v55 = vadd.f32 %v51, %v53
    %v56 = vadd.f32 %v52, %v54
    %v57 = vld [vmem:[#allocation2 + $0x4] sm:$0xff]
    %v58 = vld [vmem:[#allocation2 + $0xc] sm:$0xff]
    %v59 = vadd.f32 %v55, %v57
    %v60 = vadd.f32 %v56, %v58
    %v61 = vmul.f32 %v59, 0.2
    %v62 = vmul.f32 %v60, 0.2
    %63 = vst.msk [vmem:[#allocation6] sm:$0xff] %vm25, %v61
    %64 = vst.msk [vmem:[#allocation6 + $0x8] sm:$0xff] %vm25, %v62
    // Predicated region
    $region10: #{tpu_custom_call.1} parent=1 // pred_check
      _
    $region11: #{tpu_custom_call.1} parent=1 // pred_check_branch
      %66 = sbr.rel (0) target = $region13
    $region12: #{tpu_custom_call.1} parent=1 // pred_region
      %s68 = ssub.s32 256, 256
      %69 = vsyncadd [#allocation5], %s68
      %s70 = sshll.u32 [#allocation6], 4
      %s71 = int_to_ptr.vmem [resolvable:$true] %s70
      %76 = dma.vmem_to_hbm [thread:$0]  %s71, 256, %s1, [#allocation5], 128, 128, 8
    $region13: #{tpu_custom_call.1} parent=1 // pred_fallthru
      _
    // Predicated region
    $region14: #{tpu_custom_call.1} parent=1 // pred_check
      _
    $region15: #{tpu_custom_call.1} parent=1 // pred_check_branch
      %78 = sbr.rel (0) target = $region17
    $region16: #{tpu_custom_call.1} parent=1 // pred_region
      %79 = dma.done [#allocation5], 256
    $region17: #{tpu_custom_call.1} parent=1 // pred_fallthru
      _
    %80 = vsyncpa [#allocation4], 1
    %81 = vsyncpa [#allocation5], 1

</llo_original>
